<compile_context>
chip_gen: v6e
topology: v6e:2x2x1
jax: 0.10.0
libtpu: 0.0.40
codegen_flags: <defaults>
</compile_context>

<pallas_src>
import jax
import jax.numpy as jnp
from jax.experimental import pallas as pl
from jax.experimental.pallas import tpu as pltpu


def _make_kernel(hw: int):
    inv_hw = 1.0 / float(hw)

    def kernel(x_ref, w1t_ref, w2t_ref, o_ref):
        # x_ref  : (TB, C, HW)  input dtype (full C, HW extents -> no masking)
        # w1t_ref: (C, Cr) f32  (fc1.weight pre-transposed / pre-cast)
        # w2t_ref: (Cr, C) f32  (fc2.weight pre-transposed / pre-cast)
        x = x_ref[...]

        # Global average pooling (f32 accumulation) and global max pooling.
        avg_pool = jnp.sum(x, axis=-1, dtype=jnp.float32) * inv_hw   # (TB, C)
        max_pool = jnp.max(x, axis=-1).astype(jnp.float32)           # (TB, C)

        # Tiny channel MLP: fc1 -> relu -> fc2 -> sigmoid.
        # fc1 has no bias, so fc1(avg) + fc1(max) == fc1(avg + max).
        h = jnp.dot(avg_pool + max_pool, w1t_ref[...],
                    preferred_element_type=jnp.float32)              # (TB, Cr)
        h = jnp.maximum(h, 0.0)
        att = jax.nn.sigmoid(
            jnp.dot(h, w2t_ref[...], preferred_element_type=jnp.float32))  # (TB, C)

        # Scale the input; full-tile multiply stays in the input dtype.
        o_ref[...] = (x * att.astype(x.dtype)[:, :, None]).astype(o_ref.dtype)

    return kernel


def _vmem_bytes() -> int:
    try:
        return int(pltpu.get_tpu_info().vmem_capacity_bytes)
    except Exception:
        return 64 * 1024 * 1024       # conservative fallback: v7x = 64 MiB / TC


def _num_tensorcores() -> int:
    """Best-effort TensorCore-per-chip count (v7x = 2, v5e/v6e = 1)."""
    try:
        info = pltpu.get_tpu_info()
        for name in ("num_cores", "core_count", "num_tensorcores", "tensorcore_count"):
            v = getattr(info, name, None)
            if v:
                return int(v)
    except Exception:
        pass
    try:
        v = getattr(jax.devices()[0], "num_cores", None)
        if v:
            return int(v)
    except Exception:
        pass
    # Unknown: assume 2.  On single-TC parts the only cost of the resulting
    # step-splitting heuristic is ~0.35us of extra per-step overhead.
    return 2


def _pick_batch_tile(n: int, per_image_bytes: int, budget: int, cores: int) -> int:
    # `budget` is the byte budget for ONE (input + output) tile pair; the
    # pipeline double-buffers it, and in-kernel temporaries (pooled vectors,
    # attention) are tiny, so total VMEM use ~= 2*budget + weights.
    tb = max(1, min(n, budget // max(per_image_bytes, 1)))
    while n % tb:                      # grid must tile N exactly
        tb -= 1

    if cores >= 2:
        steps = n // tb
        if steps == 1 and n >= 2:
            # Keep >= 2 grid steps so dimension_semantics=("parallel",) can
            # shard the grid across both TensorCores.
            tb = max(1, n // 2)
            while n % tb:
                tb -= 1
        elif steps > 1 and steps % 2 == 1:
            # Prefer an even step count for a clean 2-TC split; accept only if
            # it does not more than double the step count.
            for cand in range(tb - 1, 0, -1):
                if n % cand == 0 and (n // cand) % 2 == 0 and n // cand <= 2 * steps:
                    tb = cand
                    break
    return tb


def channel_attention(x, w1, w2, donate_x: bool = False):
    """x: (N, C, H, W); w1: (Cr, C) = fc1.weight[:,:,0,0]; w2: (C, Cr) = fc2.weight[:,:,0,0]."""
    N, C, H, W = x.shape
    HW = H * W
    Cr = w1.shape[0]
    assert jnp.issubdtype(x.dtype, jnp.floating), \
        "channel_attention expects a floating-point input dtype"

    # Row-major reshape is free (no HBM pass).
    x_flat = x.reshape(N, C, HW)

    # Pre-transpose / pre-cast weights once in the wrapper; constant index_map
    # keeps them VMEM-resident with no per-step cast.
    w1t = w1.T.astype(jnp.float32)    # (C, Cr)
    w2t = w2.T.astype(jnp.float32)    # (Cr, C)

    itemsize = jnp.dtype(x.dtype).itemsize
    per_image_bytes = 2 * C * HW * itemsize           # one image: in + out tile
    weight_bytes = 2 * C * Cr * 4
    vmem_bytes = _vmem_bytes()
    vmem_limit = min((vmem_bytes * 3) // 4, 128 * 1024 * 1024)

    # Oversized-image guard: a single double-buffered (in + out) pair must fit
    # comfortably under the VMEM limit, otherwise compilation fails or the
    # pipeline degrades to single-buffering (exposed DMA).
    if 2 * per_image_bytes + weight_bytes > int(vmem_limit * 0.9):
        # TODO(synk): replace this pure-JAX fallback with an HW-chunked
        # two-pass Pallas pipeline (pool over chunks, then scale) for very
        # large CBAM feature maps.
        return channel_attention_ref(x, w1, w2)

    budget = min(vmem_bytes // 4, 32 * 1024 * 1024)   # bytes for one in+out pair
    TB = _pick_batch_tile(N, per_image_bytes, budget, _num_tensorcores())

    kernel = _make_kernel(HW)
    out = pl.pallas_call(
        kernel,
        out_shape=jax.ShapeDtypeStruct((N, C, HW), x.dtype),
        grid_spec=pltpu.PrefetchScalarGridSpec(
            num_scalar_prefetch=0,
            grid=(N // TB,),
            in_specs=[
                pl.BlockSpec((TB, C, HW), lambda n: (n, 0, 0)),
                pl.BlockSpec((C, Cr), lambda n: (0, 0)),
                pl.BlockSpec((Cr, C), lambda n: (0, 0)),
            ],
            out_specs=pl.BlockSpec((TB, C, HW), lambda n: (n, 0, 0)),
        ),
        compiler_params=pltpu.CompilerParams(
            dimension_semantics=("parallel",),
            vmem_limit_bytes=vmem_limit),
        input_output_aliases=({0: 0} if donate_x else {}),
    )(x_flat, w1t, w2t)

    return out.reshape(N, C, H, W)


def channel_attention_ref(x, w1, w2):
    """Pure-JAX reference matching the PyTorch forward (computed in f32)."""
    xf = x.astype(jnp.float32)
    w1f = w1.astype(jnp.float32)
    w2f = w2.astype(jnp.float32)
    avg_pool = jnp.mean(xf, axis=(-2, -1))                    # (N, C)
    max_pool = jnp.max(xf, axis=(-2, -1))                     # (N, C)
    out = avg_pool @ w1f.T + max_pool @ w1f.T                 # fc1(avg) + fc1(max)
    out = jnp.maximum(out, 0.0)                               # relu
    att = jax.nn.sigmoid(out @ w2f.T)                         # sigmoid(fc2(.))
    return (att[:, :, None, None] * xf).astype(x.dtype)


if __name__ == "__main__":
    key = jax.random.PRNGKey(0)

    def run_case(N, C, H, W, reduction, k, dtype=jnp.float32, atol=1e-5, rtol=1e-5):
        Cr = max(1, C // reduction)
        kx, k1, k2 = jax.random.split(k, 3)
        x = jax.random.normal(kx, (N, C, H, W), dtype=jnp.float32).astype(dtype)
        # Conv2d 1x1 weights (bias=False): fc1 -> (Cr, C), fc2 -> (C, Cr).
        w1 = jax.random.normal(k1, (Cr, C), dtype=jnp.float32) * (1.0 / jnp.sqrt(C))
        w2 = jax.random.normal(k2, (C, Cr), dtype=jnp.float32) * (1.0 / jnp.sqrt(Cr))
        out = jax.block_until_ready(channel_attention(x, w1, w2))
        ref = channel_attention_ref(x, w1, w2)
        assert out.shape == (N, C, H, W)
        assert out.dtype == x.dtype
        ok = jnp.allclose(out.astype(jnp.float32), ref.astype(jnp.float32),
                          atol=atol, rtol=rtol)
        assert ok, f"mismatch vs reference for shape {(N, C, H, W)} dtype {dtype}"

    ka, kb, kc = jax.random.split(key, 3)
    # Lane-aligned spatial (H*W = 256), f32.
    run_case(2, 32, 16, 16, 16, ka)
    # Non-128-multiple spatial (H*W = 100): exercises full-extent blocks with
    # unpadded last dim (no mask, no pad, no slice).
    run_case(4, 32, 10, 10, 16, kb)
    # bf16 inputs (attention downcast + bf16 scale): looser tolerance.
    run_case(2, 32, 14, 14, 16, kc, dtype=jnp.bfloat16, atol=5e-2, rtol=5e-2)

    print("KERNEL_OK")
</pallas_src>

<mosaic_0001>
module attributes {stable_mosaic.version = 11 : i64} {
  func.func @kernel(%arg0: i32, %arg1: memref<1x32x256xf32, #tpu.memory_space<vmem>>, %arg2: memref<32x2xf32, #tpu.memory_space<vmem>>, %arg3: memref<2x32xf32, #tpu.memory_space<vmem>>, %arg4: memref<1x32x256xf32, #tpu.memory_space<vmem>>) attributes {dimension_semantics = [#tpu.dimension_semantics<parallel>], iteration_bounds = array<i64: 2>, scalar_prefetch = 0 : i64, scratch_operands = 0 : i64, tpu.core_type = #tpu.core_type<tc>, window_params = [{transform_indices = @transform_0, window_bounds = array<i64: 1, 32, 256>}, {pipeline_mode = #tpu.pipeline_mode<synchronous>, transform_indices = @transform_1, window_bounds = array<i64: 32, 2>}, {pipeline_mode = #tpu.pipeline_mode<synchronous>, transform_indices = @transform_2, window_bounds = array<i64: 2, 32>}, {transform_indices = @transform_3, window_bounds = array<i64: 1, 32, 256>}]} {
    %c0 = arith.constant 0 : index
    %c0_0 = arith.constant 0 : index
    %c0_1 = arith.constant 0 : index
    %0 = vector.load %arg1[%c0, %c0_0, %c0_1] : memref<1x32x256xf32, #tpu.memory_space<vmem>>, vector<1x32x256xf32>
    %cst = arith.constant dense<0.000000e+00> : vector<1x32xf32>
    %1 = vector.multi_reduction <add>, %0, %cst [2] : vector<1x32x256xf32> to vector<1x32xf32>
    %cst_2 = arith.constant 3.906250e-03 : f32
    %2 = vector.broadcast %cst_2 : f32 to vector<1x32xf32>
    %3 = arith.mulf %1, %2 : vector<1x32xf32>
    %cst_3 = arith.constant dense<0xFF800000> : vector<1x32xf32>
    %4 = vector.multi_reduction <maximumf>, %0, %cst_3 [2] : vector<1x32x256xf32> to vector<1x32xf32>
    %5 = arith.addf %3, %4 : vector<1x32xf32>
    %c0_4 = arith.constant 0 : index
    %c0_5 = arith.constant 0 : index
    %6 = vector.load %arg2[%c0_4, %c0_5] : memref<32x2xf32, #tpu.memory_space<vmem>>, vector<32x2xf32>
    %cst_6 = arith.constant dense<0.000000e+00> : vector<1x2xf32>
    %7 = tpu.matmul %5, %6, %cst_6 {dimension_numbers = #tpu.dot_dimension_numbers<[1], [0], [0], [1], [0, 0, 1, 1], [], []>} : vector<1x32xf32>, vector<32x2xf32>, vector<1x2xf32> -> vector<1x2xf32>
    %cst_7 = arith.constant 0.000000e+00 : f32
    %8 = vector.broadcast %cst_7 : f32 to vector<1x2xf32>
    %9 = arith.maximumf %7, %8 : vector<1x2xf32>
    %c0_8 = arith.constant 0 : index
    %c0_9 = arith.constant 0 : index
    %10 = vector.load %arg3[%c0_8, %c0_9] : memref<2x32xf32, #tpu.memory_space<vmem>>, vector<2x32xf32>
    %cst_10 = arith.constant dense<0.000000e+00> : vector<1x32xf32>
    %11 = tpu.matmul %9, %10, %cst_10 {dimension_numbers = #tpu.dot_dimension_numbers<[1], [0], [0], [1], [0, 0, 1, 1], [], []>} : vector<1x2xf32>, vector<2x32xf32>, vector<1x32xf32> -> vector<1x32xf32>
    %12 = arith.negf %11 : vector<1x32xf32>
    %13 = math.exp %12 : vector<1x32xf32>
    %cst_11 = arith.constant 1.000000e+00 : f32
    %14 = vector.broadcast %cst_11 : f32 to vector<1x32xf32>
    %15 = arith.addf %14, %13 : vector<1x32xf32>
    %16 = arith.divf %14, %15 : vector<1x32xf32>
    %17 = vector.shape_cast %16 : vector<1x32xf32> to vector<1x32x1xf32>
    %18 = vector.broadcast %17 : vector<1x32x1xf32> to vector<1x32x256xf32>
    %19 = arith.mulf %0, %18 : vector<1x32x256xf32>
    %c0_12 = arith.constant 0 : index
    %c0_13 = arith.constant 0 : index
    %c0_14 = arith.constant 0 : index
    %20 = vector.load %arg4[%c0_12, %c0_13, %c0_14] : memref<1x32x256xf32, #tpu.memory_space<vmem>>, vector<1x32x256xf32>
    tpu.vector_store %arg4[%c0_12, %c0_13, %c0_14], %19 {strides = array<i32>} : memref<1x32x256xf32, #tpu.memory_space<vmem>>, vector<1x32x256xf32>,
    return
  }
  func.func @transform_0(%arg0: i32) -> (i32, i32, i32) {
    %c0_i32 = arith.constant 0 : i32
    %c0_i32_0 = arith.constant 0 : i32
    %c0_i32_1 = arith.constant 0 : i32
    return %arg0, %c0_i32, %c0_i32_0 : i32, i32, i32
  }
  func.func @transform_1(%arg0: i32) -> (i32, i32) {
    %c0_i32 = arith.constant 0 : i32
    %c0_i32_0 = arith.constant 0 : i32
    %c0_i32_1 = arith.constant 0 : i32
    return %c0_i32, %c0_i32_0 : i32, i32
  }
  func.func @transform_2(%arg0: i32) -> (i32, i32) {
    %c0_i32 = arith.constant 0 : i32
    %c0_i32_0 = arith.constant 0 : i32
    %c0_i32_1 = arith.constant 0 : i32
    return %c0_i32, %c0_i32_0 : i32, i32
  }
  func.func @transform_3(%arg0: i32) -> (i32, i32, i32) {
    %c0_i32 = arith.constant 0 : i32
    %c0_i32_0 = arith.constant 0 : i32
    %c0_i32_1 = arith.constant 0 : i32
    return %arg0, %c0_i32, %c0_i32_0 : i32, i32, i32
  }
}

</mosaic_0001>

<llo_original>
// kernel: tpu_custom_call.1
$region0: #{tpu_custom_call.1}
  #allocation0 [shape = 'u32[]', space=smem, size = 0x4, offset = 0x4, fixed_abs, tag = 'smem constant byte address 0x4 - core index']
  #allocation1 [shape = 'u32[144,128]{1,0:T(1,128)}', space=vmem, size = 0x12000, scoped, tag = 'internal scratch']
  %s0 = inlined_call_operand.hbm [shape: f32[2,32,256], index: 0, kind: input, shape index: {}]
  %s1 = inlined_call_operand.vmem [shape: f32[32,2], index: 1, kind: input, shape index: {}]
  %s2 = inlined_call_operand.vmem [shape: f32[2,32], index: 2, kind: input, shape index: {}]
  %s3 = inlined_call_operand.hbm [shape: f32[2,32,256], index: 3, kind: output, shape index: {}]
  %s4 = sld [smem:[#allocation0]]
  $region49: #{tpu_custom_call.1} parent=0
    _
  %s6 = ssub.s32 1, %s4
  %s7 = scalar_select 0, %s6, %s4
  $region1: #{tpu_custom_call.1} parent=0
    #allocation2 [shape = 'u8[65536]{0}', space=vmem, size = 0x10000, scoped, tag = 'input window, operand 0']
    #allocation3 [shape = 's32[2]{0}', space=sflag, size = 0x8, scoped, tag = 'scoped memory for tpu_custom_call.1']
    #allocation4 [shape = 's32[2]{0}', space=sflag, size = 0x8, scoped, tag = 'scoped memory for tpu_custom_call.1']
    #allocation5 [shape = 'u8[65536]{0}', space=vmem, size = 0x10000, scoped, tag = 'output window, operand 0']
    %8 = vsyncpa [#allocation3], 0
    %s9 = scalar_lea.sflag [#allocation3], 1
    %10 = vsyncpa %s9, 0
    %11 = vsyncpa [#allocation4], 0
    %s12 = scalar_lea.sflag [#allocation4], 1
    %13 = vsyncpa %s12, 0
    loop: start=0, step=1, limit=4
    $region2: #{tpu_custom_call.1} parent=1 // loop_pre_header
      _
    $region3: #{tpu_custom_call.1} parent=1 // loop_header
      %s15 = sphi 0, %s19
      %p16 = scmp.ge.s32.totalorder %s15, 4
      %s25 = sphi 0, %s27
      %s28 = sphi 0, %s25
      %s29 = sphi 0, %s28
      %s45 = sphi 0, %s29
      %s49 = sphi 0, %s49
      %s51 = sphi 0, %s49
      %s52 = sphi 0, %s51
      %s66 = sphi 0, %s52
      %s70 = sphi 0, %s70
      %s72 = sphi 0, %s70
      %s73 = sphi 0, %s72
      %s87 = sphi 0, %s73
      %s93 = sphi 0, %s95
      %s96 = sphi 0, %s93
      %s97 = sphi 0, %s96
      %s113 = sphi 0, %s97
    $region4: #{tpu_custom_call.1} parent=1 // loop_header_branch
      %18 = sbr.rel (%p16) target = $region8
    $region5: #{tpu_custom_call.1} parent=1 // loop_body
      %s20 = ssub.s32 %s15, 1
      %s21 = ssub.s32 %s15, 2
      %s22 = sadd.s32 %s15, 1
      %s23 = ssub.s32 %s15, %s22
      %p24 = scmp.eq.s32.totalorder %s23, 0
      %s26 = sadd.s32 %s25, 1
      %s27 = scalar_select %p24, %s25, %s26
      %p30 = pneg %p24
      %p31 = scmp.eq.s32.totalorder %s15, 1
      %p32 = por %p30, %p31
      %p33 = scmp.ne.s32.totalorder %s25, %s28
      %p34 = scmp.eq.s32.totalorder %s15, 0
      %p35 = por %p33, %p34
      %p36 = scmp.ne.s32.totalorder %s25, %s28
      %p37 = scmp.eq.s32.totalorder %s20, 1
      %p38 = por %p36, %p37
      %p39 = scmp.ne.s32.totalorder %s28, %s29
      %p40 = scmp.eq.s32.totalorder %s20, 0
      %p41 = por %p39, %p40
      %p42 = scmp.ne.s32.totalorder %s28, %s29
      %p43 = scmp.eq.s32.totalorder %s21, 1
      %p44 = por %p42, %p43
      %p46 = scmp.ne.s32.totalorder %s29, %s45
      %p47 = scmp.eq.s32.totalorder %s21, 0
      %p48 = por %p46, %p47
      %s50 = sadd.s32 %s49, 1
      %p53 = scmp.eq.s32.totalorder %s15, 1
      %p54 = scmp.ne.s32.totalorder %s49, %s51
      %p55 = scmp.eq.s32.totalorder %s15, 0
      %p56 = por %p54, %p55
      %p57 = scmp.ne.s32.totalorder %s49, %s51
      %p58 = scmp.eq.s32.totalorder %s20, 1
      %p59 = por %p57, %p58
      %p60 = scmp.ne.s32.totalorder %s51, %s52
      %p61 = scmp.eq.s32.totalorder %s20, 0
      %p62 = por %p60, %p61
      %p63 = scmp.ne.s32.totalorder %s51, %s52
      %p64 = scmp.eq.s32.totalorder %s21, 1
      %p65 = por %p63, %p64
      %p67 = scmp.ne.s32.totalorder %s52, %s66
      %p68 = scmp.eq.s32.totalorder %s21, 0
      %p69 = por %p67, %p68
      %s71 = sadd.s32 %s70, 1
      %p74 = scmp.eq.s32.totalorder %s15, 1
      %p75 = scmp.ne.s32.totalorder %s70, %s72
      %p76 = scmp.eq.s32.totalorder %s15, 0
      %p77 = por %p75, %p76
      %p78 = scmp.ne.s32.totalorder %s70, %s72
      %p79 = scmp.eq.s32.totalorder %s20, 1
      %p80 = por %p78, %p79
      %p81 = scmp.ne.s32.totalorder %s72, %s73
      %p82 = scmp.eq.s32.totalorder %s20, 0
      %p83 = por %p81, %p82
      %p84 = scmp.ne.s32.totalorder %s72, %s73
      %p85 = scmp.eq.s32.totalorder %s21, 1
      %p86 = por %p84, %p85
      %p88 = scmp.ne.s32.totalorder %s73, %s87
      %p89 = scmp.eq.s32.totalorder %s21, 0
      %p90 = por %p88, %p89
      %s91 = ssub.s32 %s15, %s22
      %p92 = scmp.eq.s32.totalorder %s91, 0
      %s94 = sadd.s32 %s93, 1
      %s95 = scalar_select %p92, %s93, %s94
      %p98 = pneg %p92
      %p99 = scmp.eq.s32.totalorder %s15, 1
      %p100 = por %p98, %p99
      %p101 = scmp.ne.s32.totalorder %s93, %s96
      %p102 = scmp.eq.s32.totalorder %s15, 0
      %p103 = por %p101, %p102
      %p104 = scmp.ne.s32.totalorder %s93, %s96
      %p105 = scmp.eq.s32.totalorder %s20, 1
      %p106 = por %p104, %p105
      %p107 = scmp.ne.s32.totalorder %s96, %s97
      %p108 = scmp.eq.s32.totalorder %s20, 0
      %p109 = por %p107, %p108
      %p110 = scmp.ne.s32.totalorder %s96, %s97
      %p111 = scmp.eq.s32.totalorder %s21, 1
      %p112 = por %p110, %p111
      %p114 = scmp.ne.s32.totalorder %s97, %s113
      %p115 = scmp.eq.s32.totalorder %s21, 0
      %p116 = por %p114, %p115
      %p117 = scmp.le.s32.totalorder 1, %s15
      %p118 = scmp.lt.s32.totalorder %s15, 3
      %p119 = pnand %p117, %p118
      %p120 = pneg %p119
      // Predicated region
      $region9: #{tpu_custom_call.1} parent=5 // pred_check
        _
      $region10: #{tpu_custom_call.1} parent=5 // pred_check_branch
        %122 = sbr.rel (%p119) target = $region12
      $region11: #{tpu_custom_call.1} parent=5 // pred_region
        %s123 = ssub.s32 %s15, 1
        // Predicated region
        $region13: #{tpu_custom_call.1} parent=11 // pred_check
          %p124 = pneg %p62
        $region14: #{tpu_custom_call.1} parent=11 // pred_check_branch
          %126 = sbr.rel (%p124) target = $region16
        $region15: #{tpu_custom_call.1} parent=11 // pred_region
          _
        $region16: #{tpu_custom_call.1} parent=11 // pred_fallthru
          _
        // Predicated region
        $region17: #{tpu_custom_call.1} parent=11 // pred_check
          %p127 = pneg %p83
        $region18: #{tpu_custom_call.1} parent=11 // pred_check_branch
          %129 = sbr.rel (%p127) target = $region20
        $region19: #{tpu_custom_call.1} parent=11 // pred_region
          _
        $region20: #{tpu_custom_call.1} parent=11 // pred_fallthru
          _
      $region12: #{tpu_custom_call.1} parent=5 // pred_fallthru
        _
      %p130 = scmp.lt.s32.totalorder %s15, 2
      // Predicated region
      $region21: #{tpu_custom_call.1} parent=5 // pred_check
        %p131 = pneg %p130
      $region22: #{tpu_custom_call.1} parent=5 // pred_check_branch
        %133 = sbr.rel (%p131) target = $region24
      $region23: #{tpu_custom_call.1} parent=5 // pred_region
        // Predicated region
        $region25: #{tpu_custom_call.1} parent=23 // pred_check
          %p134 = pneg %p35
        $region26: #{tpu_custom_call.1} parent=23 // pred_check_branch
          %136 = sbr.rel (%p134) target = $region28
        $region27: #{tpu_custom_call.1} parent=23 // pred_region
          %s137 = sand.u32 %s25, 1
          %s138 = scalar_lea.sflag [#allocation3], %s137
          %s139 = sand.u32 %s25, 1
          %s140 = smul.addr %s139, 64
          %s141 = scalar_lea.vmem [#allocation2], %s140
          %s143 = ssub.s32 1024, 1024
          %144 = vsyncadd %s138, %s143
          %s145 = smul.addr %s15, 8
          %s146 = smul.addr %s145, 128
          %s147 = scalar_lea.hbm %s0, %s146
          %s148 = sshll.u32 %s141, 4
          %s149 = int_to_ptr.vmem [resolvable:$true] %s148
          %154 = dma.hbm_to_vmem [thread:$0]  %s147, 1024, %s149, %s138, 256, 256, 16
        $region28: #{tpu_custom_call.1} parent=23 // pred_fallthru
          _
      $region24: #{tpu_custom_call.1} parent=5 // pred_fallthru
        _
      %p155 = scmp.le.s32.totalorder 1, %s15
      %p156 = scmp.lt.s32.totalorder %s15, 3
      %p157 = pnand %p155, %p156
      %p158 = pneg %p157
      // Predicated region
      $region29: #{tpu_custom_call.1} parent=5 // pred_check
        _
      $region30: #{tpu_custom_call.1} parent=5 // pred_check_branch
        %160 = sbr.rel (%p157) target = $region32
      $region31: #{tpu_custom_call.1} parent=5 // pred_region
        %s161 = ssub.s32 %s15, 1
        %s162 = sand.u32 %s28, 1
        %s163 = scalar_lea.sflag [#allocation3], %s162
        %s164 = sand.u32 %s28, 1
        %s165 = smul.addr %s164, 64
        %s166 = scalar_lea.vmem [#allocation2], %s165
        // Predicated region
        $region33: #{tpu_custom_call.1} parent=31 // pred_check
          %p167 = pneg %p41
        $region34: #{tpu_custom_call.1} parent=31 // pred_check_branch
          %169 = sbr.rel (%p167) target = $region36
        $region35: #{tpu_custom_call.1} parent=31 // pred_region
          %170 = dma.done %s163, 1024
        $region36: #{tpu_custom_call.1} parent=31 // pred_fallthru
          _
        %s171 = sand.u32 %s28, 1
        %s172 = scalar_lea.sflag [#allocation3], %s171
        %s173 = sand.u32 %s28, 1
        %s174 = smul.addr %s173, 64
        %s175 = scalar_lea.vmem [#allocation2], %s174
        %p176 = pneg %p41
        %p177 = pneg %p38
        %p178 = pneg %p62
        %p179 = pneg %p59
        %p180 = pneg %p83
        %p181 = pneg %p80
        %p182 = pneg %p109
        %p183 = pneg %p106
        %s184 = sand.u32 %s96, 1
        %s185 = scalar_lea.sflag [#allocation4], %s184
        %s186 = sand.u32 %s96, 1
        %s187 = smul.addr %s186, 64
        %s188 = scalar_lea.vmem [#allocation5], %s187
        %v189 = vld [vmem:[%s166] sm:$0xff]
        %v190 = vld [vmem:[%s166 + $0x8] sm:$0xff]
        %v191 = vld [vmem:[%s166 + $0x10] sm:$0xff]
        %v192 = vld [vmem:[%s166 + $0x18] sm:$0xff]
        %v193 = vld [vmem:[%s166 + $0x20] sm:$0xff]
        %v194 = vld [vmem:[%s166 + $0x28] sm:$0xff]
        %v195 = vld [vmem:[%s166 + $0x30] sm:$0xff]
        %v196 = vld [vmem:[%s166 + $0x38] sm:$0xff]
        %v197 = vadd.f32 %v189, %v190
        %198 = vadd.xlane.f32.xlu0 %v197
        %v199 = vpop.xlane.xlu0 %198
        %v200 = vadd.f32 %v191, %v192
        %201 = vadd.xlane.f32.xlu0 %v200
        %v202 = vpop.xlane.xlu0 %201
        %v203 = vadd.f32 %v193, %v194
        %204 = vadd.xlane.f32.xlu0 %v203
        %v205 = vpop.xlane.xlu0 %204
        %v206 = vadd.f32 %v195, %v196
        %207 = vadd.xlane.f32.xlu0 %v206
        %v208 = vpop.xlane.xlu0 %207
        %v209 = vmul.f32 %v199, 0.00390625
        %v210 = vmul.f32 %v202, 0.00390625
        %v211 = vmul.f32 %v205, 0.00390625
        %v212 = vmul.f32 %v208, 0.00390625
        %v213 = vmax.f32 %v189, %v190
        %214 = vmax.xlane.f32.xlu0 %v213
        %v215 = vpop.xlane.xlu0 %214
        %v216 = vmax.f32 %v191, %v192
        %217 = vmax.xlane.f32.xlu0 %v216
        %v218 = vpop.xlane.xlu0 %217
        %v219 = vmax.f32 %v193, %v194
        %220 = vmax.xlane.f32.xlu0 %v219
        %v221 = vpop.xlane.xlu0 %220
        %v222 = vmax.f32 %v195, %v196
        %223 = vmax.xlane.f32.xlu0 %v222
        %v224 = vpop.xlane.xlu0 %223
        %v225 = vadd.f32 %v209, %v215
        %v226 = vadd.f32 %v210, %v218
        %v227 = vadd.f32 %v211, %v221
        %v228 = vadd.f32 %v212, %v224
        %v229 = vld [vmem:[%s1] sm:$0xff]
        %v230 = vld [vmem:[%s1 + $0x8] sm:$0xff]
        %v231 = vld [vmem:[%s1 + $0x10] sm:$0xff]
        %v232 = vld [vmem:[%s1 + $0x18] sm:$0xff]
        %v237 = vlaneseq
        %v238 = vand.u32 %v237, 127
        %v239 = vlaneseq
        %v240 = vshrl.u32 %v239, 7
        %v241 = vsub.s32 %v238, %v240
        %v242 = vrot.slane %v225, %v241
        %v243 = vadd.s32 %v238, 4294967288
        %v244 = vlaneseq
        %v245 = vshrl.u32 %v244, 7
        %v246 = vsub.s32 %v243, %v245
        %v247 = vrot.slane %v226, %v246
        %vm248 = vcmask 130112
        %v249 = vsel %vm248, %v247, %v242
        %v250 = vadd.s32 %v238, 4294967280
        %v251 = vlaneseq
        %v252 = vshrl.u32 %v251, 7
        %v253 = vsub.s32 %v250, %v252
        %v254 = vrot.slane %v227, %v253
        %vm255 = vcmask 195712
        %v256 = vsel %vm255, %v254, %v249
        %v257 = vadd.s32 %v238, 4294967272
        %v258 = vlaneseq
        %v259 = vshrl.u32 %v258, 7
        %v260 = vsub.s32 %v257, %v259
        %v261 = vrot.slane %v228, %v260
        %vm262 = vcmask 261312
        %v263 = vsel %vm262, %v261, %v256
        %vm264 = vcmask 261120
        %v265 = vsel %vm264, %v263, 0
        %267 = vmatprep.subr.mxu0 0.0
        %268 = vmatpush1.msra.mxu0 0.0
        %269 = vmatprep.subr.mxu0 0.0
        %270 = vmatpush1.msra.mxu0 0.0
        %271 = vmatprep.subr.mxu0 0.0
        %272 = vmatpush1.msra.mxu0 0.0
        %273 = vmatprep.subr.mxu0 0.0
        %274 = vmatpush1.msra.mxu0 0.0
        %275 = vmatprep.subr.mxu0 0.0
        %276 = vmatpush1.msra.mxu0 0.0
        %277 = vmatprep.subr.mxu0 0.0
        %278 = vmatpush1.msra.mxu0 0.0
        %279 = vmatprep.subr.mxu0 0.0
        %280 = vmatpush1.msra.mxu0 0.0
        %281 = vmatprep.subr.mxu0 0.0
        %282 = vmatpush1.msra.mxu0 0.0
        %283 = vmatprep.subr.mxu0 0.0
        %284 = vmatpush1.msra.mxu0 0.0
        %285 = vmatprep.subr.mxu0 0.0
        %286 = vmatpush1.msra.mxu0 0.0
        %287 = vmatprep.subr.mxu0 0.0
        %288 = vmatpush1.msra.mxu0 0.0
        %289 = vmatprep.subr.mxu0 0.0
        %290 = vmatpush1.msra.mxu0 0.0
        %291 = vmatprep.subr.mxu0 0.0
        %292 = vmatpush1.msra.mxu0 %v232
        %293 = vmatprep.subr.mxu0 0.0
        %294 = vmatpush1.msra.mxu0 %v231
        %295 = vmatprep.subr.mxu0 0.0
        %296 = vmatpush1.msra.mxu0 %v230
        %297 = vmatprep.subr.mxu0 0.0
        %298 = vmatpush1.msra.mxu0 %v229
        %299 = vmatprep.subr.mxu0 0.0
        %300 = vmatpush2.msra.mxu0 0.0
        %301 = vmatprep.subr.mxu0 0.0
        %302 = vmatpush2.msra.mxu0 0.0
        %303 = vmatprep.subr.mxu0 0.0
        %304 = vmatpush2.msra.mxu0 0.0
        %305 = vmatprep.subr.mxu0 0.0
        %306 = vmatpush2.msra.mxu0 0.0
        %307 = vmatprep.subr.mxu0 0.0
        %308 = vmatpush2.msra.mxu0 0.0
        %309 = vmatprep.subr.mxu0 0.0
        %310 = vmatpush2.msra.mxu0 0.0
        %311 = vmatprep.subr.mxu0 0.0
        %312 = vmatpush2.msra.mxu0 0.0
        %313 = vmatprep.subr.mxu0 0.0
        %314 = vmatpush2.msra.mxu0 0.0
        %315 = vmatprep.subr.mxu0 0.0
        %316 = vmatpush2.msra.mxu0 0.0
        %317 = vmatprep.subr.mxu0 0.0
        %318 = vmatpush2.msra.mxu0 0.0
        %319 = vmatprep.subr.mxu0 0.0
        %320 = vmatpush2.msra.mxu0 0.0
        %321 = vmatprep.subr.mxu0 0.0
        %322 = vmatpush2.msra.mxu0 0.0
        %323 = vmatprep.subr.mxu0 0.0
        %324 = vmatpush2.msra.mxu0 0.0
        %325 = vmatprep.subr.mxu0 0.0
        %326 = vmatpush2.msra.mxu0 0.0
        %327 = vmatprep.subr.mxu0 0.0
        %328 = vmatpush2.msra.mxu0 0.0
        %329 = vmatprep.subr.mxu0 0.0
        %330 = vmatpush2.msra.mxu0 0.0
        %331 = vmatprep.mubr.f32.mxu0 0.0
        %332 = vmatmul.mubr.f32.gmra.mxu0 %v265
        %v333 = vpop.f32.mrf.mxu0
        %v334 = vadd.f32 0.0, %v333
        %v335 = vpop.f32.mrf.mxu0
        %336 = vdwg.mxu0
        %v337 = vmax.f32 %v334, 0.0
        %v338 = vld [vmem:[%s2] sm:$0x3]
        %vm339 = vcmask 15360
        %v341 = vsel %vm339, %v337, 0
        %vm343 = vcmask 1041408
        %v345 = vsel %vm343, %v338, 0
        %347 = vmatprep.subr.mxu0 0.0
        %348 = vmatpush1.msra.mxu0 0.0
        %349 = vmatprep.subr.mxu0 0.0
        %350 = vmatpush1.msra.mxu0 0.0
        %351 = vmatprep.subr.mxu0 0.0
        %352 = vmatpush1.msra.mxu0 0.0
        %353 = vmatprep.subr.mxu0 0.0
        %354 = vmatpush1.msra.mxu0 0.0
        %355 = vmatprep.subr.mxu0 0.0
        %356 = vmatpush1.msra.mxu0 0.0
        %357 = vmatprep.subr.mxu0 0.0
        %358 = vmatpush1.msra.mxu0 0.0
        %359 = vmatprep.subr.mxu0 0.0
        %360 = vmatpush1.msra.mxu0 0.0
        %361 = vmatprep.subr.mxu0 0.0
        %362 = vmatpush1.msra.mxu0 0.0
        %363 = vmatprep.subr.mxu0 0.0
        %364 = vmatpush1.msra.mxu0 0.0
        %365 = vmatprep.subr.mxu0 0.0
        %366 = vmatpush1.msra.mxu0 0.0
        %367 = vmatprep.subr.mxu0 0.0
        %368 = vmatpush1.msra.mxu0 0.0
        %369 = vmatprep.subr.mxu0 0.0
        %370 = vmatpush1.msra.mxu0 0.0
        %371 = vmatprep.subr.mxu0 0.0
        %372 = vmatpush1.msra.mxu0 0.0
        %373 = vmatprep.subr.mxu0 0.0
        %374 = vmatpush1.msra.mxu0 0.0
        %375 = vmatprep.subr.mxu0 0.0
        %376 = vmatpush1.msra.mxu0 0.0
        %377 = vmatprep.subr.mxu0 0.0
        %378 = vmatpush1.msra.mxu0 %v345
        %379 = vmatprep.subr.mxu0 0.0
        %380 = vmatpush2.msra.mxu0 0.0
        %381 = vmatprep.subr.mxu0 0.0
        %382 = vmatpush2.msra.mxu0 0.0
        %383 = vmatprep.subr.mxu0 0.0
        %384 = vmatpush2.msra.mxu0 0.0
        %385 = vmatprep.subr.mxu0 0.0
        %386 = vmatpush2.msra.mxu0 0.0
        %387 = vmatprep.subr.mxu0 0.0
        %388 = vmatpush2.msra.mxu0 0.0
        %389 = vmatprep.subr.mxu0 0.0
        %390 = vmatpush2.msra.mxu0 0.0
        %391 = vmatprep.subr.mxu0 0.0
        %392 = vmatpush2.msra.mxu0 0.0
        %393 = vmatprep.subr.mxu0 0.0
        %394 = vmatpush2.msra.mxu0 0.0
        %395 = vmatprep.subr.mxu0 0.0
        %396 = vmatpush2.msra.mxu0 0.0
        %397 = vmatprep.subr.mxu0 0.0
        %398 = vmatpush2.msra.mxu0 0.0
        %399 = vmatprep.subr.mxu0 0.0
        %400 = vmatpush2.msra.mxu0 0.0
        %401 = vmatprep.subr.mxu0 0.0
        %402 = vmatpush2.msra.mxu0 0.0
        %403 = vmatprep.subr.mxu0 0.0
        %404 = vmatpush2.msra.mxu0 0.0
        %405 = vmatprep.subr.mxu0 0.0
        %406 = vmatpush2.msra.mxu0 0.0
        %407 = vmatprep.subr.mxu0 0.0
        %408 = vmatpush2.msra.mxu0 0.0
        %409 = vmatprep.subr.mxu0 0.0
        %410 = vmatpush2.msra.mxu0 0.0
        %411 = vmatprep.mubr.f32.mxu0 0.0
        %412 = vmatmul.mubr.f32.gmra.mxu0 %v341
        %v413 = vpop.f32.mrf.mxu0
        %v414 = vadd.f32 0.0, %v413
        %v415 = vpop.f32.mrf.mxu0
        %416 = vdwg.mxu0
        %v417 = vxor.u32 %v414, 2147483648
        %v418 = vmul.f32 %v417, 1.442695
        %v419 = vpow.pop %v418
        %v420 = vadd.f32 %v419, 1.0
        %v421 = vrcp.pop %v420
        %v422 = vmul.f32 1.0, %v421
        %v423 = vlaneseq
        %v424 = vshrl.u32 %v423, 7
        %v425 = vsub.s32 0, %v424
        %v426 = vrot.slane %v422, %v425
        %428 = vbcast.lane.b32.xlu0 %v426, 256
        %v429 = vpop.permute.xlu0 %428
        %s431 = sor.u32 256, 8
        %432 = vbcast.lane.b32.xlu0 %v426, %s431
        %v433 = vpop.permute.xlu0 %432
        %s435 = sor.u32 256, 16
        %436 = vbcast.lane.b32.xlu0 %v426, %s435
        %v437 = vpop.permute.xlu0 %436
        %s439 = sor.u32 256, 24
        %440 = vbcast.lane.b32.xlu0 %v426, %s439
        %v441 = vpop.permute.xlu0 %440
        %v442 = vmul.f32 %v189, %v429
        %v443 = vmul.f32 %v190, %v429
        %v444 = vmul.f32 %v191, %v433
        %v445 = vmul.f32 %v192, %v433
        %v446 = vmul.f32 %v193, %v437
        %v447 = vmul.f32 %v194, %v437
        %v448 = vmul.f32 %v195, %v441
        %v449 = vmul.f32 %v196, %v441
        %450 = vst [vmem:[%s188] sm:$0xff] %v442
        %451 = vst [vmem:[%s188 + $0x8] sm:$0xff] %v443
        %452 = vst [vmem:[%s188 + $0x10] sm:$0xff] %v444
        %453 = vst [vmem:[%s188 + $0x18] sm:$0xff] %v445
        %454 = vst [vmem:[%s188 + $0x20] sm:$0xff] %v446
        %455 = vst [vmem:[%s188 + $0x28] sm:$0xff] %v447
        %456 = vst [vmem:[%s188 + $0x30] sm:$0xff] %v448
        %457 = vst [vmem:[%s188 + $0x38] sm:$0xff] %v449
        %s458 = sand.u32 %s96, 1
        %s459 = scalar_lea.sflag [#allocation4], %s458
        %s460 = sand.u32 %s96, 1
        %s461 = smul.addr %s460, 64
        %s462 = scalar_lea.vmem [#allocation5], %s461
        // Predicated region
        $region37: #{tpu_custom_call.1} parent=31 // pred_check
          %p463 = pneg %p106
        $region38: #{tpu_custom_call.1} parent=31 // pred_check_branch
          %465 = sbr.rel (%p463) target = $region40
        $region39: #{tpu_custom_call.1} parent=31 // pred_region
          %s467 = ssub.s32 1024, 1024
          %468 = vsyncadd %s459, %s467
          %s469 = smul.addr %s20, 8
          %s470 = smul.addr %s469, 128
          %s471 = scalar_lea.hbm %s3, %s470
          %s472 = sshll.u32 %s462, 4
          %s473 = int_to_ptr.vmem [resolvable:$true] %s472
          %478 = dma.vmem_to_hbm [thread:$0]  %s473, 1024, %s471, %s459, 256, 256, 16
        $region40: #{tpu_custom_call.1} parent=31 // pred_fallthru
          _
      $region32: #{tpu_custom_call.1} parent=5 // pred_fallthru
        _
      %p479 = scmp.le.s32.totalorder 2, %s15
      // Predicated region
      $region41: #{tpu_custom_call.1} parent=5 // pred_check
        %p480 = pneg %p479
      $region42: #{tpu_custom_call.1} parent=5 // pred_check_branch
        %482 = sbr.rel (%p480) target = $region44
      $region43: #{tpu_custom_call.1} parent=5 // pred_region
        %s483 = ssub.s32 %s15, 2
        // Predicated region
        $region45: #{tpu_custom_call.1} parent=43 // pred_check
          %p484 = pneg %p112
        $region46: #{tpu_custom_call.1} parent=43 // pred_check_branch
          %486 = sbr.rel (%p484) target = $region48
        $region47: #{tpu_custom_call.1} parent=43 // pred_region
          %s487 = sand.u32 %s97, 1
          %s488 = scalar_lea.sflag [#allocation4], %s487
          %s489 = sand.u32 %s97, 1
          %s490 = smul.addr %s489, 64
          %s491 = scalar_lea.vmem [#allocation5], %s490
          %492 = dma.done %s488, 1024
        $region48: #{tpu_custom_call.1} parent=43 // pred_fallthru
          _
      $region44: #{tpu_custom_call.1} parent=5 // pred_fallthru
        _
    $region6: #{tpu_custom_call.1} parent=1 // loop_footer
      %s19 = sadd.s32 1, %s15
    $region7: #{tpu_custom_call.1} parent=1 // loop_footer_branch
      %14 = sbr.rel target = $region3
    $region8: #{tpu_custom_call.1} parent=1 // loop_exit
      _
    %493 = vsyncpa [#allocation3], 1
    %s494 = scalar_lea.sflag [#allocation3], 1
    %495 = vsyncpa %s494, 1
    %496 = vsyncpa [#allocation4], 1
    %s497 = scalar_lea.sflag [#allocation4], 1
    %498 = vsyncpa %s497, 1

</llo_original>
